<compile_context>
chip_gen: v5e
topology: v5e:2x2
jax: 0.10.0
libtpu: 0.0.40
codegen_flags: <defaults>
</compile_context>

<pallas_src>
import math

import jax
import jax.numpy as jnp
from jax.experimental import pallas as pl
from jax.experimental.pallas import tpu as pltpu


_VMEM_LIMIT_BYTES = 48 * 1024 * 1024  # <= v7x's 64 MiB/TC; fine on v5e/v6e


# ---------------------------------------------------------------------------
# Kernel
# ---------------------------------------------------------------------------
def _linear_generator_kernel(x_ref,
                             w12_ref, b12_ref,
                             w3_ref, b3_ref,
                             w4_ref, b4_ref,
                             o_ref):
    # Compute dtype for MXU operands: bf16 when the streamed weights are bf16
    # (bf16 x bf16 MXU fast path), f32 otherwise.  Accumulation is always f32.
    cdt = w3_ref.dtype

    x = x_ref[...].astype(cdt)

    # Folded layer 1+2: [tile_b, k_pad] @ [k_pad, 512]  (k_pad = 8, zero-padded K).
    h = jnp.dot(x, w12_ref[...], preferred_element_type=jnp.float32)
    h = h + b12_ref[...].astype(jnp.float32)

    # Layer 3: [tile_b, 512] @ [512, 256]
    h = jnp.dot(h.astype(cdt), w3_ref[...], preferred_element_type=jnp.float32)
    h = h + b3_ref[...].astype(jnp.float32)

    # Layer 4: [tile_b, 256] @ [256, out]
    out = jnp.dot(h.astype(cdt), w4_ref[...], preferred_element_type=jnp.float32)
    out = out + b4_ref[...].astype(jnp.float32)

    o_ref[...] = out.astype(o_ref.dtype)


# ---------------------------------------------------------------------------
# Wrapper
# ---------------------------------------------------------------------------
def _pick_tile_b(batch):
    """Large, MXU-friendly batch tiles, but keep >= 2 grid blocks when possible so
    v7x's two TensorCores both get work ("parallel" batch axis)."""
    if batch <= 256:
        return batch
    tile = (batch // 2 // 256) * 256
    return int(min(2048, max(256, tile)))


def linear_generator(x, params, *, tile_b=None):
    """x: [batch, in]; params: 4 x (w: [in, out], b: [1, out])  (W is [in, out],
    i.e. transposed vs. PyTorch nn.Linear's [out, in])."""
    (w1, b1), (w2, b2), (w3, b3), (w4, b4) = params
    batch, in_features = x.shape
    out_features = w4.shape[1]

    f32 = jnp.float32
    hi = jax.lax.Precision.HIGHEST

    # Pre-fold layers 1 and 2 (pure affine, no nonlinearity in between):
    #   (x @ W1 + b1) @ W2 + b2  ==  x @ (W1 @ W2) + (b1 @ W2 + b2)
    w12 = jnp.dot(w1.astype(f32), w2.astype(f32), precision=hi)
    b12 = jnp.dot(b1.astype(f32), w2.astype(f32), precision=hi) + b2.astype(f32)
    w12 = w12.astype(w2.dtype)     # stream as bf16 if the weights are bf16
    # biases stay f32 (b12 is f32 by construction)

    # Pad the tiny contraction dim (in_features=3) up to a sublane multiple; the
    # zero rows/cols contribute nothing, so semantics are unchanged.
    k_pad = max(8, -(-in_features // 8) * 8)
    if k_pad != in_features:
        x_in = jnp.pad(x, ((0, 0), (0, k_pad - in_features)))
        w12 = jnp.pad(w12, ((0, k_pad - in_features), (0, 0)))
    else:
        x_in = x

    tile_b = _pick_tile_b(batch) if tile_b is None else min(int(tile_b), batch)
    grid = (pl.cdiv(batch, tile_b),)

    row_map = lambda i: (i, 0)                          # batch-tiled activations
    resident = lambda a: pl.BlockSpec(a.shape, lambda i: (0, 0))  # VMEM-resident

    flops = 2 * batch * (k_pad * w12.shape[1]
                         + w3.shape[0] * w3.shape[1]
                         + w4.shape[0] * out_features)
    bytes_accessed = (
        int(x_in.size) * x_in.dtype.itemsize
        + sum(int(a.size) * a.dtype.itemsize
              for a in (w12, b12, w3, b3, w4, b4))
        + batch * out_features * x.dtype.itemsize)

    return pl.pallas_call(
        _linear_generator_kernel,
        out_shape=jax.ShapeDtypeStruct((batch, out_features), x.dtype),
        grid=grid,
        in_specs=[
            pl.BlockSpec((tile_b, k_pad), row_map),
            resident(w12), resident(b12),
            resident(w3), resident(b3),
            resident(w4), resident(b4),
        ],
        out_specs=pl.BlockSpec((tile_b, out_features), row_map),
        compiler_params=pltpu.CompilerParams(
            dimension_semantics=("parallel",),      # v7x: shard batch over 2 TCs
            vmem_limit_bytes=_VMEM_LIMIT_BYTES,
        ),
        cost_estimate=pl.CostEstimate(
            flops=flops, transcendentals=0, bytes_accessed=bytes_accessed),
    )(x_in, w12, b12, w3, b3, w4, b4)


# ---------------------------------------------------------------------------
# Init + reference
# ---------------------------------------------------------------------------
def init_params(key, in_features=3):
    """Matches nn.Linear default init U(-1/sqrt(fan_in), 1/sqrt(fan_in))."""
    dims = [in_features, 1024, 512, 256, in_features]
    params = []
    for i in range(4):
        fan_in, fan_out = dims[i], dims[i + 1]
        key, kw, kb = jax.random.split(key, 3)
        bound = 1.0 / math.sqrt(fan_in)
        w = jax.random.uniform(kw, (fan_in, fan_out), jnp.float32, -bound, bound)
        b = jax.random.uniform(kb, (1, fan_out), jnp.float32, -bound, bound)
        params.append((w, b))
    return params


def reference_forward(x, params):
    hi = jax.lax.Precision.HIGHEST
    h = x.astype(jnp.float32)
    for w, b in params:
        h = jnp.dot(h, w.astype(jnp.float32),
                    preferred_element_type=jnp.float32, precision=hi) \
            + b.astype(jnp.float32)
    return h


# ---------------------------------------------------------------------------
# Main
# ---------------------------------------------------------------------------
if __name__ == "__main__":
    key = jax.random.PRNGKey(0)
    k_param, k_x, k_x_big = jax.random.split(key, 3)

    in_features = 3
    params = init_params(k_param, in_features=in_features)

    # Small-shape check (module's tiny feature dims, batch=8; single grid block).
    batch = 8
    x = jax.random.normal(k_x, (batch, in_features), jnp.float32)
    out = jax.block_until_ready(linear_generator(x, params))
    ref = reference_forward(x, params)
    assert out.shape == (batch, in_features), out.shape
    err = float(jnp.max(jnp.abs(out - ref)))
    assert jnp.allclose(out, ref, atol=1e-3, rtol=1e-3), f"f32 small-batch err {err}"

    # Gridded path: batch > tile_b exercises the multi-step grid (>= 2 blocks, so
    # both v7x TensorCores would be active) with VMEM-resident folded weights.
    big_batch = 1024
    x_big = jax.random.normal(k_x_big, (big_batch, in_features), jnp.float32)
    out_big = jax.block_until_ready(linear_generator(x_big, params))
    ref_big = reference_forward(x_big, params)
    err = float(jnp.max(jnp.abs(out_big - ref_big)))
    assert jnp.allclose(out_big, ref_big, atol=1e-3, rtol=1e-3), f"f32 gridded err {err}"

    # bf16 weight streaming: activations are cast to bf16 per dot, so the MXU runs
    # homogeneous bf16 x bf16 with f32 accumulation.  Activation rounding compounds
    # over three matmuls vs. the f32-activation reference -> looser tolerance.
    params_bf16 = [(w.astype(jnp.bfloat16), b) for w, b in params]
    out_bf16 = jax.block_until_ready(linear_generator(x_big, params_bf16))
    ref_bf16 = reference_forward(x_big, params_bf16)
    err = float(jnp.max(jnp.abs(out_bf16 - ref_bf16)))
    assert jnp.allclose(out_bf16, ref_bf16, atol=3e-2, rtol=3e-2), f"bf16 err {err}"

    print("KERNEL_OK")
</pallas_src>

<mosaic_0001>
module attributes {stable_mosaic.version = 11 : i64} {
  func.func @_linear_generator_kernel(%arg0: i32, %arg1: memref<8x8xf32, #tpu.memory_space<vmem>>, %arg2: memref<8x512xf32, #tpu.memory_space<vmem>>, %arg3: memref<1x512xf32, #tpu.memory_space<vmem>>, %arg4: memref<512x256xf32, #tpu.memory_space<vmem>>, %arg5: memref<1x256xf32, #tpu.memory_space<vmem>>, %arg6: memref<256x3xf32, #tpu.memory_space<vmem>>, %arg7: memref<1x3xf32, #tpu.memory_space<vmem>>, %arg8: memref<8x3xf32, #tpu.memory_space<vmem>>) attributes {dimension_semantics = [#tpu.dimension_semantics<parallel>], iteration_bounds = array<i64: 1>, scalar_prefetch = 0 : i64, scratch_operands = 0 : i64, tpu.core_type = #tpu.core_type<tc>, window_params = [{transform_indices = @transform_0, window_bounds = array<i64: 8, 8>}, {pipeline_mode = #tpu.pipeline_mode<synchronous>, transform_indices = @transform_1, window_bounds = array<i64: 8, 512>}, {pipeline_mode = #tpu.pipeline_mode<synchronous>, transform_indices = @transform_2, window_bounds = array<i64: 1, 512>}, {pipeline_mode = #tpu.pipeline_mode<synchronous>, transform_indices = @transform_3, window_bounds = array<i64: 512, 256>}, {pipeline_mode = #tpu.pipeline_mode<synchronous>, transform_indices = @transform_4, window_bounds = array<i64: 1, 256>}, {pipeline_mode = #tpu.pipeline_mode<synchronous>, transform_indices = @transform_5, window_bounds = array<i64: 256, 3>}, {pipeline_mode = #tpu.pipeline_mode<synchronous>, transform_indices = @transform_6, window_bounds = array<i64: 1, 3>}, {transform_indices = @transform_7, window_bounds = array<i64: 8, 3>}]} {
    %c0 = arith.constant 0 : index
    %c0_0 = arith.constant 0 : index
    %0 = vector.load %arg1[%c0, %c0_0] : memref<8x8xf32, #tpu.memory_space<vmem>>, vector<8x8xf32>
    %c0_1 = arith.constant 0 : index
    %c0_2 = arith.constant 0 : index
    %1 = vector.load %arg2[%c0_1, %c0_2] : memref<8x512xf32, #tpu.memory_space<vmem>>, vector<8x512xf32>
    %cst = arith.constant dense<0.000000e+00> : vector<8x512xf32>
    %2 = tpu.matmul %0, %1, %cst {dimension_numbers = #tpu.dot_dimension_numbers<[1], [0], [0], [1], [0, 0, 1, 1], [], []>} : vector<8x8xf32>, vector<8x512xf32>, vector<8x512xf32> -> vector<8x512xf32>
    %c0_3 = arith.constant 0 : index
    %c0_4 = arith.constant 0 : index
    %3 = vector.load %arg3[%c0_3, %c0_4] : memref<1x512xf32, #tpu.memory_space<vmem>>, vector<1x512xf32>
    %4 = vector.broadcast %3 : vector<1x512xf32> to vector<8x512xf32>
    %5 = arith.addf %2, %4 : vector<8x512xf32>
    %c0_5 = arith.constant 0 : index
    %c0_6 = arith.constant 0 : index
    %6 = vector.load %arg4[%c0_5, %c0_6] : memref<512x256xf32, #tpu.memory_space<vmem>>, vector<512x256xf32>
    %cst_7 = arith.constant dense<0.000000e+00> : vector<8x256xf32>
    %7 = tpu.matmul %5, %6, %cst_7 {dimension_numbers = #tpu.dot_dimension_numbers<[1], [0], [0], [1], [0, 0, 1, 1], [], []>} : vector<8x512xf32>, vector<512x256xf32>, vector<8x256xf32> -> vector<8x256xf32>
    %c0_8 = arith.constant 0 : index
    %c0_9 = arith.constant 0 : index
    %8 = vector.load %arg5[%c0_8, %c0_9] : memref<1x256xf32, #tpu.memory_space<vmem>>, vector<1x256xf32>
    %9 = vector.broadcast %8 : vector<1x256xf32> to vector<8x256xf32>
    %10 = arith.addf %7, %9 : vector<8x256xf32>
    %c0_10 = arith.constant 0 : index
    %c0_11 = arith.constant 0 : index
    %11 = vector.load %arg6[%c0_10, %c0_11] : memref<256x3xf32, #tpu.memory_space<vmem>>, vector<256x3xf32>
    %cst_12 = arith.constant dense<0.000000e+00> : vector<8x3xf32>
    %12 = tpu.matmul %10, %11, %cst_12 {dimension_numbers = #tpu.dot_dimension_numbers<[1], [0], [0], [1], [0, 0, 1, 1], [], []>} : vector<8x256xf32>, vector<256x3xf32>, vector<8x3xf32> -> vector<8x3xf32>
    %c0_13 = arith.constant 0 : index
    %c0_14 = arith.constant 0 : index
    %13 = vector.load %arg7[%c0_13, %c0_14] : memref<1x3xf32, #tpu.memory_space<vmem>>, vector<1x3xf32>
    %14 = vector.broadcast %13 : vector<1x3xf32> to vector<8x3xf32>
    %15 = arith.addf %12, %14 : vector<8x3xf32>
    %c0_15 = arith.constant 0 : index
    %c0_16 = arith.constant 0 : index
    %16 = vector.load %arg8[%c0_15, %c0_16] : memref<8x3xf32, #tpu.memory_space<vmem>>, vector<8x3xf32>
    tpu.vector_store %arg8[%c0_15, %c0_16], %15 {strides = array<i32>} : memref<8x3xf32, #tpu.memory_space<vmem>>, vector<8x3xf32>,
    return
  }
  func.func @transform_0(%arg0: i32) -> (i32, i32) {
    %c0_i32 = arith.constant 0 : i32
    %c0_i32_0 = arith.constant 0 : i32
    return %arg0, %c0_i32 : i32, i32
  }
  func.func @transform_1(%arg0: i32) -> (i32, i32) {
    %c0_i32 = arith.constant 0 : i32
    %c0_i32_0 = arith.constant 0 : i32
    %c0_i32_1 = arith.constant 0 : i32
    return %c0_i32, %c0_i32_0 : i32, i32
  }
  func.func @transform_2(%arg0: i32) -> (i32, i32) {
    %c0_i32 = arith.constant 0 : i32
    %c0_i32_0 = arith.constant 0 : i32
    %c0_i32_1 = arith.constant 0 : i32
    return %c0_i32, %c0_i32_0 : i32, i32
  }
  func.func @transform_3(%arg0: i32) -> (i32, i32) {
    %c0_i32 = arith.constant 0 : i32
    %c0_i32_0 = arith.constant 0 : i32
    %c0_i32_1 = arith.constant 0 : i32
    return %c0_i32, %c0_i32_0 : i32, i32
  }
  func.func @transform_4(%arg0: i32) -> (i32, i32) {
    %c0_i32 = arith.constant 0 : i32
    %c0_i32_0 = arith.constant 0 : i32
    %c0_i32_1 = arith.constant 0 : i32
    return %c0_i32, %c0_i32_0 : i32, i32
  }
  func.func @transform_5(%arg0: i32) -> (i32, i32) {
    %c0_i32 = arith.constant 0 : i32
    %c0_i32_0 = arith.constant 0 : i32
    %c0_i32_1 = arith.constant 0 : i32
    return %c0_i32, %c0_i32_0 : i32, i32
  }
  func.func @transform_6(%arg0: i32) -> (i32, i32) {
    %c0_i32 = arith.constant 0 : i32
    %c0_i32_0 = arith.constant 0 : i32
    %c0_i32_1 = arith.constant 0 : i32
    return %c0_i32, %c0_i32_0 : i32, i32
  }
  func.func @transform_7(%arg0: i32) -> (i32, i32) {
    %c0_i32 = arith.constant 0 : i32
    %c0_i32_0 = arith.constant 0 : i32
    return %arg0, %c0_i32 : i32, i32
  }
}

</mosaic_0001>

<llo_original>
// kernel: tpu_custom_call.1
$region0: #{tpu_custom_call.1}
  #allocation0 [shape = 'u32[]', space=smem, size = 0x4, offset = 0x4, fixed_abs, tag = 'smem constant byte address 0x4 - core index']
  #allocation1 [shape = 'u32[72,128]{1,0:T(1,128)}', space=vmem, size = 0x9000, scoped, tag = 'internal scratch']
  %s0 = inlined_call_operand.vmem [shape: f32[8,8], index: 0, kind: input, shape index: {}]
  %s1 = inlined_call_operand.vmem [shape: f32[8,512], index: 1, kind: input, shape index: {}]
  %s2 = inlined_call_operand.vmem [shape: f32[1,512], index: 2, kind: input, shape index: {}]
  %s3 = inlined_call_operand.hbm [shape: f32[512,256], index: 3, kind: input, shape index: {}]
  %s4 = inlined_call_operand.vmem [shape: f32[1,256], index: 4, kind: input, shape index: {}]
  %s5 = inlined_call_operand.vmem [shape: f32[256,3], index: 5, kind: input, shape index: {}]
  %s6 = inlined_call_operand.vmem [shape: f32[1,3], index: 6, kind: input, shape index: {}]
  %s7 = inlined_call_operand.vmem [shape: f32[8,3], index: 7, kind: output, shape index: {}]
  %s8 = sld [smem:[#allocation0]]
  $region42: #{tpu_custom_call.1} parent=0
    _
  %s10 = ssub.s32 1, %s8
  %s11 = scalar_select 0, %s10, %s8
  $region1: #{tpu_custom_call.1} parent=0
    #allocation2 [shape = 'u8[524288]{0}', space=vmem, size = 0x80000, scoped, tag = 'input window, operand 3, single buffered']
    #allocation3 [shape = 's32[1]{0}', space=sflag, size = 0x4, scoped, tag = 'scoped memory for tpu_custom_call.1']
    %12 = vsyncpa [#allocation3], 0
    // Predicated region
    $region2: #{tpu_custom_call.1} parent=1 // pred_check
      _
    $region3: #{tpu_custom_call.1} parent=1 // pred_check_branch
      %14 = sbr.rel (0) target = $region5
    $region4: #{tpu_custom_call.1} parent=1 // pred_region
      _
    $region5: #{tpu_custom_call.1} parent=1 // pred_fallthru
      _
    // Predicated region
    $region6: #{tpu_custom_call.1} parent=1 // pred_check
      _
    $region7: #{tpu_custom_call.1} parent=1 // pred_check_branch
      %16 = sbr.rel (0) target = $region9
    $region8: #{tpu_custom_call.1} parent=1 // pred_region
      _
    $region9: #{tpu_custom_call.1} parent=1 // pred_fallthru
      _
    // Predicated region
    $region10: #{tpu_custom_call.1} parent=1 // pred_check
      _
    $region11: #{tpu_custom_call.1} parent=1 // pred_check_branch
      %18 = sbr.rel (0) target = $region13
    $region12: #{tpu_custom_call.1} parent=1 // pred_region
      _
    $region13: #{tpu_custom_call.1} parent=1 // pred_fallthru
      _
    // Predicated region
    $region14: #{tpu_custom_call.1} parent=1 // pred_check
      _
    $region15: #{tpu_custom_call.1} parent=1 // pred_check_branch
      %20 = sbr.rel (0) target = $region17
    $region16: #{tpu_custom_call.1} parent=1 // pred_region
      %22 = vsyncadd [#allocation3], 0
      %s23 = sshll.u32 %s3, 4
      %s24 = int_to_ptr.hbm [resolvable:$true] %s23
      %s25 = sshll.u32 [#allocation2], 4
      %s26 = int_to_ptr.vmem [resolvable:$true] %s25
      %31 = dma.hbm_to_vmem [thread:$0]  %s24, 16384, %s26, [#allocation3], 256, 256, 16
    $region17: #{tpu_custom_call.1} parent=1 // pred_fallthru
      _
    // Predicated region
    $region18: #{tpu_custom_call.1} parent=1 // pred_check
      _
    $region19: #{tpu_custom_call.1} parent=1 // pred_check_branch
      %33 = sbr.rel (0) target = $region21
    $region20: #{tpu_custom_call.1} parent=1 // pred_region
      _
    $region21: #{tpu_custom_call.1} parent=1 // pred_fallthru
      _
    // Predicated region
    $region22: #{tpu_custom_call.1} parent=1 // pred_check
      _
    $region23: #{tpu_custom_call.1} parent=1 // pred_check_branch
      %35 = sbr.rel (0) target = $region25
    $region24: #{tpu_custom_call.1} parent=1 // pred_region
      _
    $region25: #{tpu_custom_call.1} parent=1 // pred_fallthru
      _
    // Predicated region
    $region26: #{tpu_custom_call.1} parent=1 // pred_check
      _
    $region27: #{tpu_custom_call.1} parent=1 // pred_check_branch
      %37 = sbr.rel (0) target = $region29
    $region28: #{tpu_custom_call.1} parent=1 // pred_region
      _
    $region29: #{tpu_custom_call.1} parent=1 // pred_fallthru
      _
    // Predicated region
    $region30: #{tpu_custom_call.1} parent=1 // pred_check
      _
    $region31: #{tpu_custom_call.1} parent=1 // pred_check_branch
      %39 = sbr.rel (0) target = $region33
    $region32: #{tpu_custom_call.1} parent=1 // pred_region
      %41 = dma.done [#allocation3], 16384
    $region33: #{tpu_custom_call.1} parent=1 // pred_fallthru
      _
    %v42 = vld [vmem:[%s0] sm:$0xff]
    %v43 = vld [vmem:[%s1] sm:$0xff]
    %v44 = vld [vmem:[%s1 + $0x8] sm:$0xff]
    %v45 = vld [vmem:[%s1 + $0x10] sm:$0xff]
    %v46 = vld [vmem:[%s1 + $0x18] sm:$0xff]
    %v47 = vld [vmem:[%s2] sm:$0xf]
    %v49 = vperm.slane %v47, 0
    %v50 = vperm.slane %v47, 1
    %v51 = vperm.slane %v47, 2
    %v52 = vperm.slane %v47, 3
    %vm57 = vcmask 64512
    %v59 = vsel %vm57, %v42, 0
    %61 = vmatpush.msra.mxu0 0.0
    %62 = vmatpush.msra.mxu0 0.0
    %63 = vmatpush.msra.mxu0 0.0
    %64 = vmatpush.msra.mxu0 0.0
    %65 = vmatpush.msra.mxu0 0.0
    %66 = vmatpush.msra.mxu0 0.0
    %67 = vmatpush.msra.mxu0 0.0
    %68 = vmatpush.msra.mxu0 0.0
    %69 = vmatpush.msra.mxu0 0.0
    %70 = vmatpush.msra.mxu0 0.0
    %71 = vmatpush.msra.mxu0 0.0
    %72 = vmatpush.msra.mxu0 0.0
    %73 = vmatpush.msra.mxu0 0.0
    %74 = vmatpush.msra.mxu0 0.0
    %75 = vmatpush.msra.mxu0 0.0
    %76 = vmatpush.msra.mxu0 %v43
    %77 = vmatmul.f32.gmra.mxu0 %v59
    %v78 = vpop.f32.mrf.mxu0
    %v79 = vadd.f32 %v49, %v78
    %80 = vdwg.mxu0
    %81 = vmatpush.msra.mxu0 0.0
    %82 = vmatpush.msra.mxu0 0.0
    %83 = vmatpush.msra.mxu0 0.0
    %84 = vmatpush.msra.mxu0 0.0
    %85 = vmatpush.msra.mxu0 0.0
    %86 = vmatpush.msra.mxu0 0.0
    %87 = vmatpush.msra.mxu0 0.0
    %88 = vmatpush.msra.mxu0 0.0
    %89 = vmatpush.msra.mxu0 0.0
    %90 = vmatpush.msra.mxu0 0.0
    %91 = vmatpush.msra.mxu0 0.0
    %92 = vmatpush.msra.mxu0 0.0
    %93 = vmatpush.msra.mxu0 0.0
    %94 = vmatpush.msra.mxu0 0.0
    %95 = vmatpush.msra.mxu0 0.0
    %96 = vmatpush.msra.mxu0 %v44
    %97 = vmatmul.f32.gmra.mxu0 %v59
    %v98 = vpop.f32.mrf.mxu0
    %v99 = vadd.f32 %v50, %v98
    %100 = vdwg.mxu0
    %101 = vmatpush.msra.mxu0 0.0
    %102 = vmatpush.msra.mxu0 0.0
    %103 = vmatpush.msra.mxu0 0.0
    %104 = vmatpush.msra.mxu0 0.0
    %105 = vmatpush.msra.mxu0 0.0
    %106 = vmatpush.msra.mxu0 0.0
    %107 = vmatpush.msra.mxu0 0.0
    %108 = vmatpush.msra.mxu0 0.0
    %109 = vmatpush.msra.mxu0 0.0
    %110 = vmatpush.msra.mxu0 0.0
    %111 = vmatpush.msra.mxu0 0.0
    %112 = vmatpush.msra.mxu0 0.0
    %113 = vmatpush.msra.mxu0 0.0
    %114 = vmatpush.msra.mxu0 0.0
    %115 = vmatpush.msra.mxu0 0.0
    %116 = vmatpush.msra.mxu0 %v45
    %117 = vmatmul.f32.gmra.mxu0 %v59
    %v118 = vpop.f32.mrf.mxu0
    %v119 = vadd.f32 %v51, %v118
    %120 = vdwg.mxu0
    %121 = vmatpush.msra.mxu0 0.0
    %122 = vmatpush.msra.mxu0 0.0
    %123 = vmatpush.msra.mxu0 0.0
    %124 = vmatpush.msra.mxu0 0.0
    %125 = vmatpush.msra.mxu0 0.0
    %126 = vmatpush.msra.mxu0 0.0
    %127 = vmatpush.msra.mxu0 0.0
    %128 = vmatpush.msra.mxu0 0.0
    %129 = vmatpush.msra.mxu0 0.0
    %130 = vmatpush.msra.mxu0 0.0
    %131 = vmatpush.msra.mxu0 0.0
    %132 = vmatpush.msra.mxu0 0.0
    %133 = vmatpush.msra.mxu0 0.0
    %134 = vmatpush.msra.mxu0 0.0
    %135 = vmatpush.msra.mxu0 0.0
    %136 = vmatpush.msra.mxu0 %v46
    %137 = vmatmul.f32.gmra.mxu0 %v59
    %v138 = vpop.f32.mrf.mxu0
    %v139 = vadd.f32 %v52, %v138
    %140 = vdwg.mxu0
    %v141 = vld [vmem:[#allocation2] sm:$0xff]
    %v142 = vld [vmem:[#allocation2 + $0x8] sm:$0xff]
    %v143 = vld [vmem:[#allocation2 + $0x10] sm:$0xff]
    %v144 = vld [vmem:[#allocation2 + $0x18] sm:$0xff]
    %v145 = vld [vmem:[#allocation2 + $0x20] sm:$0xff]
    %v146 = vld [vmem:[#allocation2 + $0x28] sm:$0xff]
    %v147 = vld [vmem:[#allocation2 + $0x30] sm:$0xff]
    %v148 = vld [vmem:[#allocation2 + $0x38] sm:$0xff]
    %v149 = vld [vmem:[#allocation2 + $0x40] sm:$0xff]
    %v150 = vld [vmem:[#allocation2 + $0x48] sm:$0xff]
    %v151 = vld [vmem:[#allocation2 + $0x50] sm:$0xff]
    %v152 = vld [vmem:[#allocation2 + $0x58] sm:$0xff]
    %v153 = vld [vmem:[#allocation2 + $0x60] sm:$0xff]
    %v154 = vld [vmem:[#allocation2 + $0x68] sm:$0xff]
    %v155 = vld [vmem:[#allocation2 + $0x70] sm:$0xff]
    %v156 = vld [vmem:[#allocation2 + $0x78] sm:$0xff]
    %v157 = vld [vmem:[#allocation2 + $0x80] sm:$0xff]
    %v158 = vld [vmem:[#allocation2 + $0x88] sm:$0xff]
    %v159 = vld [vmem:[#allocation2 + $0x90] sm:$0xff]
    %v160 = vld [vmem:[#allocation2 + $0x98] sm:$0xff]
    %v161 = vld [vmem:[#allocation2 + $0xa0] sm:$0xff]
    %v162 = vld [vmem:[#allocation2 + $0xa8] sm:$0xff]
    %v163 = vld [vmem:[#allocation2 + $0xb0] sm:$0xff]
    %v164 = vld [vmem:[#allocation2 + $0xb8] sm:$0xff]
    %v165 = vld [vmem:[#allocation2 + $0xc0] sm:$0xff]
    %v166 = vld [vmem:[#allocation2 + $0xc8] sm:$0xff]
    %v167 = vld [vmem:[#allocation2 + $0xd0] sm:$0xff]
    %v168 = vld [vmem:[#allocation2 + $0xd8] sm:$0xff]
    %v169 = vld [vmem:[#allocation2 + $0xe0] sm:$0xff]
    %v170 = vld [vmem:[#allocation2 + $0xe8] sm:$0xff]
    %v171 = vld [vmem:[#allocation2 + $0xf0] sm:$0xff]
    %v172 = vld [vmem:[#allocation2 + $0xf8] sm:$0xff]
    %v173 = vld [vmem:[#allocation2 + $0x100] sm:$0xff]
    %v174 = vld [vmem:[#allocation2 + $0x108] sm:$0xff]
    %v175 = vld [vmem:[#allocation2 + $0x110] sm:$0xff]
    %v176 = vld [vmem:[#allocation2 + $0x118] sm:$0xff]
    %v177 = vld [vmem:[#allocation2 + $0x120] sm:$0xff]
    %v178 = vld [vmem:[#allocation2 + $0x128] sm:$0xff]
    %v179 = vld [vmem:[#allocation2 + $0x130] sm:$0xff]
    %v180 = vld [vmem:[#allocation2 + $0x138] sm:$0xff]
    %v181 = vld [vmem:[#allocation2 + $0x140] sm:$0xff]
    %v182 = vld [vmem:[#allocation2 + $0x148] sm:$0xff]
    %v183 = vld [vmem:[#allocation2 + $0x150] sm:$0xff]
    %v184 = vld [vmem:[#allocation2 + $0x158] sm:$0xff]
    %v185 = vld [vmem:[#allocation2 + $0x160] sm:$0xff]
    %v186 = vld [vmem:[#allocation2 + $0x168] sm:$0xff]
    %v187 = vld [vmem:[#allocation2 + $0x170] sm:$0xff]
    %v188 = vld [vmem:[#allocation2 + $0x178] sm:$0xff]
    %v189 = vld [vmem:[#allocation2 + $0x180] sm:$0xff]
    %v190 = vld [vmem:[#allocation2 + $0x188] sm:$0xff]
    %v191 = vld [vmem:[#allocation2 + $0x190] sm:$0xff]
    %v192 = vld [vmem:[#allocation2 + $0x198] sm:$0xff]
    %v193 = vld [vmem:[#allocation2 + $0x1a0] sm:$0xff]
    %v194 = vld [vmem:[#allocation2 + $0x1a8] sm:$0xff]
    %v195 = vld [vmem:[#allocation2 + $0x1b0] sm:$0xff]
    %v196 = vld [vmem:[#allocation2 + $0x1b8] sm:$0xff]
    %v197 = vld [vmem:[#allocation2 + $0x1c0] sm:$0xff]
    %v198 = vld [vmem:[#allocation2 + $0x1c8] sm:$0xff]
    %v199 = vld [vmem:[#allocation2 + $0x1d0] sm:$0xff]
    %v200 = vld [vmem:[#allocation2 + $0x1d8] sm:$0xff]
    %v201 = vld [vmem:[#allocation2 + $0x1e0] sm:$0xff]
    %v202 = vld [vmem:[#allocation2 + $0x1e8] sm:$0xff]
    %v203 = vld [vmem:[#allocation2 + $0x1f0] sm:$0xff]
    %v204 = vld [vmem:[#allocation2 + $0x1f8] sm:$0xff]
    %v205 = vld [vmem:[#allocation2 + $0x200] sm:$0xff]
    %v206 = vld [vmem:[#allocation2 + $0x208] sm:$0xff]
    %v207 = vld [vmem:[#allocation2 + $0x210] sm:$0xff]
    %v208 = vld [vmem:[#allocation2 + $0x218] sm:$0xff]
    %v209 = vld [vmem:[#allocation2 + $0x220] sm:$0xff]
    %v210 = vld [vmem:[#allocation2 + $0x228] sm:$0xff]
    %v211 = vld [vmem:[#allocation2 + $0x230] sm:$0xff]
    %v212 = vld [vmem:[#allocation2 + $0x238] sm:$0xff]
    %v213 = vld [vmem:[#allocation2 + $0x240] sm:$0xff]
    %v214 = vld [vmem:[#allocation2 + $0x248] sm:$0xff]
    %v215 = vld [vmem:[#allocation2 + $0x250] sm:$0xff]
    %v216 = vld [vmem:[#allocation2 + $0x258] sm:$0xff]
    %v217 = vld [vmem:[#allocation2 + $0x260] sm:$0xff]
    %v218 = vld [vmem:[#allocation2 + $0x268] sm:$0xff]
    %v219 = vld [vmem:[#allocation2 + $0x270] sm:$0xff]
    %v220 = vld [vmem:[#allocation2 + $0x278] sm:$0xff]
    %v221 = vld [vmem:[#allocation2 + $0x280] sm:$0xff]
    %v222 = vld [vmem:[#allocation2 + $0x288] sm:$0xff]
    %v223 = vld [vmem:[#allocation2 + $0x290] sm:$0xff]
    %v224 = vld [vmem:[#allocation2 + $0x298] sm:$0xff]
    %v225 = vld [vmem:[#allocation2 + $0x2a0] sm:$0xff]
    %v226 = vld [vmem:[#allocation2 + $0x2a8] sm:$0xff]
    %v227 = vld [vmem:[#allocation2 + $0x2b0] sm:$0xff]
    %v228 = vld [vmem:[#allocation2 + $0x2b8] sm:$0xff]
    %v229 = vld [vmem:[#allocation2 + $0x2c0] sm:$0xff]
    %v230 = vld [vmem:[#allocation2 + $0x2c8] sm:$0xff]
    %v231 = vld [vmem:[#allocation2 + $0x2d0] sm:$0xff]
    %v232 = vld [vmem:[#allocation2 + $0x2d8] sm:$0xff]
    %v233 = vld [vmem:[#allocation2 + $0x2e0] sm:$0xff]
    %v234 = vld [vmem:[#allocation2 + $0x2e8] sm:$0xff]
    %v235 = vld [vmem:[#allocation2 + $0x2f0] sm:$0xff]
    %v236 = vld [vmem:[#allocation2 + $0x2f8] sm:$0xff]
    %v237 = vld [vmem:[#allocation2 + $0x300] sm:$0xff]
    %v238 = vld [vmem:[#allocation2 + $0x308] sm:$0xff]
    %v239 = vld [vmem:[#allocation2 + $0x310] sm:$0xff]
    %v240 = vld [vmem:[#allocation2 + $0x318] sm:$0xff]
    %v241 = vld [vmem:[#allocation2 + $0x320] sm:$0xff]
    %v242 = vld [vmem:[#allocation2 + $0x328] sm:$0xff]
    %v243 = vld [vmem:[#allocation2 + $0x330] sm:$0xff]
    %v244 = vld [vmem:[#allocation2 + $0x338] sm:$0xff]
    %v245 = vld [vmem:[#allocation2 + $0x340] sm:$0xff]
    %v246 = vld [vmem:[#allocation2 + $0x348] sm:$0xff]
    %v247 = vld [vmem:[#allocation2 + $0x350] sm:$0xff]
    %v248 = vld [vmem:[#allocation2 + $0x358] sm:$0xff]
    %v249 = vld [vmem:[#allocation2 + $0x360] sm:$0xff]
    %v250 = vld [vmem:[#allocation2 + $0x368] sm:$0xff]
    %v251 = vld [vmem:[#allocation2 + $0x370] sm:$0xff]
    %v252 = vld [vmem:[#allocation2 + $0x378] sm:$0xff]
    %v253 = vld [vmem:[#allocation2 + $0x380] sm:$0xff]
    %v254 = vld [vmem:[#allocation2 + $0x388] sm:$0xff]
    %v255 = vld [vmem:[#allocation2 + $0x390] sm:$0xff]
    %v256 = vld [vmem:[#allocation2 + $0x398] sm:$0xff]
    %v257 = vld [vmem:[#allocation2 + $0x3a0] sm:$0xff]
    %v258 = vld [vmem:[#allocation2 + $0x3a8] sm:$0xff]
    %v259 = vld [vmem:[#allocation2 + $0x3b0] sm:$0xff]
    %v260 = vld [vmem:[#allocation2 + $0x3b8] sm:$0xff]
    %v261 = vld [vmem:[#allocation2 + $0x3c0] sm:$0xff]
    %v262 = vld [vmem:[#allocation2 + $0x3c8] sm:$0xff]
    %v263 = vld [vmem:[#allocation2 + $0x3d0] sm:$0xff]
    %v264 = vld [vmem:[#allocation2 + $0x3d8] sm:$0xff]
    %v265 = vld [vmem:[#allocation2 + $0x3e0] sm:$0xff]
    %v266 = vld [vmem:[#allocation2 + $0x3e8] sm:$0xff]
    %v267 = vld [vmem:[#allocation2 + $0x3f0] sm:$0xff]
    %v268 = vld [vmem:[#allocation2 + $0x3f8] sm:$0xff]
    %v269 = vld [vmem:[%s4] sm:$0x3]
    %v271 = vperm.slane %v269, 0
    %v272 = vperm.slane %v269, 1
    %275 = vmatpush.msra.mxu0 %v171
    %276 = vmatpush.msra.mxu0 %v169
    %277 = vmatpush.msra.mxu0 %v167
    %278 = vmatpush.msra.mxu0 %v165
    %279 = vmatpush.msra.mxu0 %v163
    %280 = vmatpush.msra.mxu0 %v161
    %281 = vmatpush.msra.mxu0 %v159
    %282 = vmatpush.msra.mxu0 %v157
    %283 = vmatpush.msra.mxu0 %v155
    %284 = vmatpush.msra.mxu0 %v153
    %285 = vmatpush.msra.mxu0 %v151
    %286 = vmatpush.msra.mxu0 %v149
    %287 = vmatpush.msra.mxu0 %v147
    %288 = vmatpush.msra.mxu0 %v145
    %289 = vmatpush.msra.mxu0 %v143
    %290 = vmatpush.msra.mxu0 %v141
    %291 = vmatmul.f32.gmra.mxu0 %v79
    %v292 = vpop.f32.mrf.mxu0
    %v293 = vadd.f32 %v271, %v292
    %294 = vdwg.mxu0
    %295 = vmatpush.msra.mxu0 %v203
    %296 = vmatpush.msra.mxu0 %v201
    %297 = vmatpush.msra.mxu0 %v199
    %298 = vmatpush.msra.mxu0 %v197
    %299 = vmatpush.msra.mxu0 %v195
    %300 = vmatpush.msra.mxu0 %v193
    %301 = vmatpush.msra.mxu0 %v191
    %302 = vmatpush.msra.mxu0 %v189
    %303 = vmatpush.msra.mxu0 %v187
    %304 = vmatpush.msra.mxu0 %v185
    %305 = vmatpush.msra.mxu0 %v183
    %306 = vmatpush.msra.mxu0 %v181
    %307 = vmatpush.msra.mxu0 %v179
    %308 = vmatpush.msra.mxu0 %v177
    %309 = vmatpush.msra.mxu0 %v175
    %310 = vmatpush.msra.mxu0 %v173
    %311 = vmatmul.f32.gmra.mxu0 %v99
    %v312 = vpop.f32.mrf.mxu0
    %v313 = vadd.f32 %v293, %v312
    %314 = vdwg.mxu0
    %315 = vmatpush.msra.mxu0 %v235
    %316 = vmatpush.msra.mxu0 %v233
    %317 = vmatpush.msra.mxu0 %v231
    %318 = vmatpush.msra.mxu0 %v229
    %319 = vmatpush.msra.mxu0 %v227
    %320 = vmatpush.msra.mxu0 %v225
    %321 = vmatpush.msra.mxu0 %v223
    %322 = vmatpush.msra.mxu0 %v221
    %323 = vmatpush.msra.mxu0 %v219
    %324 = vmatpush.msra.mxu0 %v217
    %325 = vmatpush.msra.mxu0 %v215
    %326 = vmatpush.msra.mxu0 %v213
    %327 = vmatpush.msra.mxu0 %v211
    %328 = vmatpush.msra.mxu0 %v209
    %329 = vmatpush.msra.mxu0 %v207
    %330 = vmatpush.msra.mxu0 %v205
    %331 = vmatmul.f32.gmra.mxu0 %v119
    %v332 = vpop.f32.mrf.mxu0
    %v333 = vadd.f32 %v313, %v332
    %334 = vdwg.mxu0
    %335 = vmatpush.msra.mxu0 %v267
    %336 = vmatpush.msra.mxu0 %v265
    %337 = vmatpush.msra.mxu0 %v263
    %338 = vmatpush.msra.mxu0 %v261
    %339 = vmatpush.msra.mxu0 %v259
    %340 = vmatpush.msra.mxu0 %v257
    %341 = vmatpush.msra.mxu0 %v255
    %342 = vmatpush.msra.mxu0 %v253
    %343 = vmatpush.msra.mxu0 %v251
    %344 = vmatpush.msra.mxu0 %v249
    %345 = vmatpush.msra.mxu0 %v247
    %346 = vmatpush.msra.mxu0 %v245
    %347 = vmatpush.msra.mxu0 %v243
    %348 = vmatpush.msra.mxu0 %v241
    %349 = vmatpush.msra.mxu0 %v239
    %350 = vmatpush.msra.mxu0 %v237
    %351 = vmatmul.f32.gmra.mxu0 %v139
    %v352 = vpop.f32.mrf.mxu0
    %v353 = vadd.f32 %v333, %v352
    %354 = vdwg.mxu0
    %355 = vmatpush.msra.mxu0 %v172
    %356 = vmatpush.msra.mxu0 %v170
    %357 = vmatpush.msra.mxu0 %v168
    %358 = vmatpush.msra.mxu0 %v166
    %359 = vmatpush.msra.mxu0 %v164
    %360 = vmatpush.msra.mxu0 %v162
    %361 = vmatpush.msra.mxu0 %v160
    %362 = vmatpush.msra.mxu0 %v158
    %363 = vmatpush.msra.mxu0 %v156
    %364 = vmatpush.msra.mxu0 %v154
    %365 = vmatpush.msra.mxu0 %v152
    %366 = vmatpush.msra.mxu0 %v150
    %367 = vmatpush.msra.mxu0 %v148
    %368 = vmatpush.msra.mxu0 %v146
    %369 = vmatpush.msra.mxu0 %v144
    %370 = vmatpush.msra.mxu0 %v142
    %371 = vmatmul.f32.gmra.mxu0 %v79
    %v372 = vpop.f32.mrf.mxu0
    %v373 = vadd.f32 %v272, %v372
    %374 = vdwg.mxu0
    %375 = vmatpush.msra.mxu0 %v204
    %376 = vmatpush.msra.mxu0 %v202
    %377 = vmatpush.msra.mxu0 %v200
    %378 = vmatpush.msra.mxu0 %v198
    %379 = vmatpush.msra.mxu0 %v196
    %380 = vmatpush.msra.mxu0 %v194
    %381 = vmatpush.msra.mxu0 %v192
    %382 = vmatpush.msra.mxu0 %v190
    %383 = vmatpush.msra.mxu0 %v188
    %384 = vmatpush.msra.mxu0 %v186
    %385 = vmatpush.msra.mxu0 %v184
    %386 = vmatpush.msra.mxu0 %v182
    %387 = vmatpush.msra.mxu0 %v180
    %388 = vmatpush.msra.mxu0 %v178
    %389 = vmatpush.msra.mxu0 %v176
    %390 = vmatpush.msra.mxu0 %v174
    %391 = vmatmul.f32.gmra.mxu0 %v99
    %v392 = vpop.f32.mrf.mxu0
    %v393 = vadd.f32 %v373, %v392
    %394 = vdwg.mxu0
    %395 = vmatpush.msra.mxu0 %v236
    %396 = vmatpush.msra.mxu0 %v234
    %397 = vmatpush.msra.mxu0 %v232
    %398 = vmatpush.msra.mxu0 %v230
    %399 = vmatpush.msra.mxu0 %v228
    %400 = vmatpush.msra.mxu0 %v226
    %401 = vmatpush.msra.mxu0 %v224
    %402 = vmatpush.msra.mxu0 %v222
    %403 = vmatpush.msra.mxu0 %v220
    %404 = vmatpush.msra.mxu0 %v218
    %405 = vmatpush.msra.mxu0 %v216
    %406 = vmatpush.msra.mxu0 %v214
    %407 = vmatpush.msra.mxu0 %v212
    %408 = vmatpush.msra.mxu0 %v210
    %409 = vmatpush.msra.mxu0 %v208
    %410 = vmatpush.msra.mxu0 %v206
    %411 = vmatmul.f32.gmra.mxu0 %v119
    %v412 = vpop.f32.mrf.mxu0
    %v413 = vadd.f32 %v393, %v412
    %414 = vdwg.mxu0
    %415 = vmatpush.msra.mxu0 %v268
    %416 = vmatpush.msra.mxu0 %v266
    %417 = vmatpush.msra.mxu0 %v264
    %418 = vmatpush.msra.mxu0 %v262
    %419 = vmatpush.msra.mxu0 %v260
    %420 = vmatpush.msra.mxu0 %v258
    %421 = vmatpush.msra.mxu0 %v256
    %422 = vmatpush.msra.mxu0 %v254
    %423 = vmatpush.msra.mxu0 %v252
    %424 = vmatpush.msra.mxu0 %v250
    %425 = vmatpush.msra.mxu0 %v248
    %426 = vmatpush.msra.mxu0 %v246
    %427 = vmatpush.msra.mxu0 %v244
    %428 = vmatpush.msra.mxu0 %v242
    %429 = vmatpush.msra.mxu0 %v240
    %430 = vmatpush.msra.mxu0 %v238
    %431 = vmatmul.f32.gmra.mxu0 %v139
    %v432 = vpop.f32.mrf.mxu0
    %v433 = vadd.f32 %v413, %v432
    %434 = vdwg.mxu0
    %v435 = vld [vmem:[%s5] sm:$0xff]
    %v436 = vld [vmem:[%s5 + $0x8] sm:$0xff]
    %v437 = vld [vmem:[%s5 + $0x10] sm:$0xff]
    %v438 = vld [vmem:[%s5 + $0x18] sm:$0xff]
    %v439 = vld [vmem:[%s5 + $0x20] sm:$0xff]
    %v440 = vld [vmem:[%s5 + $0x28] sm:$0xff]
    %v441 = vld [vmem:[%s5 + $0x30] sm:$0xff]
    %v442 = vld [vmem:[%s5 + $0x38] sm:$0xff]
    %v443 = vld [vmem:[%s5 + $0x40] sm:$0xff]
    %v444 = vld [vmem:[%s5 + $0x48] sm:$0xff]
    %v445 = vld [vmem:[%s5 + $0x50] sm:$0xff]
    %v446 = vld [vmem:[%s5 + $0x58] sm:$0xff]
    %v447 = vld [vmem:[%s5 + $0x60] sm:$0xff]
    %v448 = vld [vmem:[%s5 + $0x68] sm:$0xff]
    %v449 = vld [vmem:[%s5 + $0x70] sm:$0xff]
    %v450 = vld [vmem:[%s5 + $0x78] sm:$0xff]
    %v451 = vld [vmem:[%s5 + $0x80] sm:$0xff]
    %v452 = vld [vmem:[%s5 + $0x88] sm:$0xff]
    %v453 = vld [vmem:[%s5 + $0x90] sm:$0xff]
    %v454 = vld [vmem:[%s5 + $0x98] sm:$0xff]
    %v455 = vld [vmem:[%s5 + $0xa0] sm:$0xff]
    %v456 = vld [vmem:[%s5 + $0xa8] sm:$0xff]
    %v457 = vld [vmem:[%s5 + $0xb0] sm:$0xff]
    %v458 = vld [vmem:[%s5 + $0xb8] sm:$0xff]
    %v459 = vld [vmem:[%s5 + $0xc0] sm:$0xff]
    %v460 = vld [vmem:[%s5 + $0xc8] sm:$0xff]
    %v461 = vld [vmem:[%s5 + $0xd0] sm:$0xff]
    %v462 = vld [vmem:[%s5 + $0xd8] sm:$0xff]
    %v463 = vld [vmem:[%s5 + $0xe0] sm:$0xff]
    %v464 = vld [vmem:[%s5 + $0xe8] sm:$0xff]
    %v465 = vld [vmem:[%s5 + $0xf0] sm:$0xff]
    %v466 = vld [vmem:[%s5 + $0xf8] sm:$0xff]
    %v467 = vld [vmem:[%s6] sm:$0x1]
    %v469 = vperm.slane %v467, 0
    %471 = vmatpush.msra.mxu0 %v450
    %472 = vmatpush.msra.mxu0 %v449
    %473 = vmatpush.msra.mxu0 %v448
    %474 = vmatpush.msra.mxu0 %v447
    %475 = vmatpush.msra.mxu0 %v446
    %476 = vmatpush.msra.mxu0 %v445
    %477 = vmatpush.msra.mxu0 %v444
    %478 = vmatpush.msra.mxu0 %v443
    %479 = vmatpush.msra.mxu0 %v442
    %480 = vmatpush.msra.mxu0 %v441
    %481 = vmatpush.msra.mxu0 %v440
    %482 = vmatpush.msra.mxu0 %v439
    %483 = vmatpush.msra.mxu0 %v438
    %484 = vmatpush.msra.mxu0 %v437
    %485 = vmatpush.msra.mxu0 %v436
    %486 = vmatpush.msra.mxu0 %v435
    %487 = vmatmul.f32.gmra.mxu0 %v353
    %v488 = vpop.f32.mrf.mxu0
    %v489 = vadd.f32 %v469, %v488
    %490 = vdwg.mxu0
    %491 = vmatpush.msra.mxu0 %v466
    %492 = vmatpush.msra.mxu0 %v465
    %493 = vmatpush.msra.mxu0 %v464
    %494 = vmatpush.msra.mxu0 %v463
    %495 = vmatpush.msra.mxu0 %v462
    %496 = vmatpush.msra.mxu0 %v461
    %497 = vmatpush.msra.mxu0 %v460
    %498 = vmatpush.msra.mxu0 %v459
    %499 = vmatpush.msra.mxu0 %v458
    %500 = vmatpush.msra.mxu0 %v457
    %501 = vmatpush.msra.mxu0 %v456
    %502 = vmatpush.msra.mxu0 %v455
    %503 = vmatpush.msra.mxu0 %v454
    %504 = vmatpush.msra.mxu0 %v453
    %505 = vmatpush.msra.mxu0 %v452
    %506 = vmatpush.msra.mxu0 %v451
    %507 = vmatmul.f32.gmra.mxu0 %v433
    %v508 = vpop.f32.mrf.mxu0
    %v509 = vadd.f32 %v489, %v508
    %510 = vdwg.mxu0
    %vm511 = vcmask 23552
    %512 = vst.msk [vmem:[%s7] sm:$0xff] %vm511, %v509
    // Predicated region
    $region34: #{tpu_custom_call.1} parent=1 // pred_check
      _
    $region35: #{tpu_custom_call.1} parent=1 // pred_check_branch
      %514 = sbr.rel (0) target = $region37
    $region36: #{tpu_custom_call.1} parent=1 // pred_region
      _
    $region37: #{tpu_custom_call.1} parent=1 // pred_fallthru
      _
    // Predicated region
    $region38: #{tpu_custom_call.1} parent=1 // pred_check
      _
    $region39: #{tpu_custom_call.1} parent=1 // pred_check_branch
      %516 = sbr.rel (0) target = $region41
    $region40: #{tpu_custom_call.1} parent=1 // pred_region
      _
    $region41: #{tpu_custom_call.1} parent=1 // pred_fallthru
      _
    %517 = vsyncpa [#allocation3], 1

</llo_original>
